<compile_context>
chip_gen: v7x
topology: tpu7x:2x2x1
jax: 0.10.0
libtpu: 0.0.40
codegen_flags: <defaults>
</compile_context>

<pallas_src>
import functools

import jax
import jax.numpy as jnp
from jax.experimental import pallas as pl
from jax.experimental.pallas import tpu as pltpu


def _rmsnorm_kernel(x_ref, w_ref, o_ref, *, eps, inv_h):
    # x_ref: (tile, H) rows; w_ref: (1, H) weight resident in VMEM.
    xf = x_ref[...].astype(jnp.float32)
    # Cross-lane reduction -> XLU, rsqrt -> EUP; VPU keeps the multiplies.
    ss = jnp.sum(xf * xf, axis=-1, keepdims=True)
    inv = jax.lax.rsqrt(ss * inv_h + eps)
    w = w_ref[...].astype(jnp.float32)
    o_ref[...] = (xf * inv * w).astype(o_ref.dtype)


def _sublane_multiple(dtype) -> int:
    itemsize = jnp.dtype(dtype).itemsize
    if itemsize == 1:
        return 32
    if itemsize == 2:
        return 16
    return 8


def _vmem_capacity_bytes() -> int:
    try:
        return int(pltpu.get_tpu_info().vmem_capacity_bytes)
    except Exception:
        # Fallback (v5e/v6e physical VMEM).
        return 128 * 1024 * 1024


def _pick_row_tile(rows, h, dtype, vmem_capacity) -> int:
    itemsize = jnp.dtype(dtype).itemsize
    sublane = _sublane_multiple(dtype)
    if rows <= sublane:
        # Single full-extent block along the row axis (always a legal block).
        return rows

    # ~Half of physical VMEM for the pipelined tiles, leaving headroom for
    # compiler scratch.  v7x (64 MiB) -> 32 MiB; v5e/v6e (128 MiB) -> 64 MiB.
    budget = min(vmem_capacity // 2, 64 * 1024 * 1024)
    # Per row: double-buffered input tile + double-buffered output tile, plus
    # one f32 intermediate (the x^2 / upcast temporary).
    bytes_per_row = 4 * h * itemsize + 4 * h
    fit = max(sublane, budget // max(bytes_per_row, 1))

    # Amortize the fixed per-grid-step overhead: aim for >= ~8 MiB of (in+out)
    # HBM traffic per step, but never less than 1024 rows if VMEM allows.
    target_step_bytes = 8 * 1024 * 1024
    target_rows = max(1024, target_step_bytes // max(2 * h * itemsize, 1))
    tile = min(fit, target_rows)

    # Keep at least 2 grid steps so the "parallel" axis can be split across
    # TensorCores (v7x megacore) whenever there is enough work.
    half_rows_aligned = pl.cdiv(pl.cdiv(rows, 2), sublane) * sublane
    tile = min(tile, half_rows_aligned)

    tile = max(sublane, (tile // sublane) * sublane)
    return tile


def rmsnorm(x, weight, *, eps=1e-5, row_tile=None):
    """x: (batch, seq, hidden); weight: (hidden,)."""
    b, s, h = x.shape
    rows = b * s
    x2d = x.reshape(rows, h)
    w2d = weight.reshape(1, h)  # cast to f32 happens inside the kernel

    vmem_capacity = _vmem_capacity_bytes()
    if row_tile is None:
        row_tile = _pick_row_tile(rows, h, x.dtype, vmem_capacity)
    else:
        sub = _sublane_multiple(x.dtype)
        if rows <= sub:
            row_tile = rows
        else:
            row_tile = max(sub, (row_tile // sub) * sub)

    grid_rows = pl.cdiv(rows, row_tile)

    # Scoped-VMEM limit: 3/4 of physical, capped at 100 MiB.
    # v7x -> 48 MiB, v5e/v6e -> 96 MiB; always above the tile budget.
    vmem_limit = min((vmem_capacity * 3) // 4, 100 * 1024 * 1024)

    kernel = functools.partial(_rmsnorm_kernel, eps=eps, inv_h=1.0 / h)

    out2d = pl.pallas_call(
        kernel,
        out_shape=jax.ShapeDtypeStruct((rows, h), x.dtype),
        grid=(grid_rows,),
        in_specs=[
            pl.BlockSpec((row_tile, h), lambda i: (i, 0)),
            pl.BlockSpec((1, h), lambda i: (0, 0)),
        ],
        out_specs=pl.BlockSpec((row_tile, h), lambda i: (i, 0)),
        compiler_params=pltpu.CompilerParams(
            dimension_semantics=("parallel",),
            vmem_limit_bytes=int(vmem_limit),
        ),
    )(x2d, w2d)

    return out2d.reshape(b, s, h)


def rmsnorm_ref(x, weight, eps=1e-5):
    xf = x.astype(jnp.float32)
    ms = jnp.mean(xf * xf, axis=-1, keepdims=True)
    return (xf * jax.lax.rsqrt(ms + eps) * weight.astype(jnp.float32)).astype(x.dtype)


if __name__ == "__main__":
    key = jax.random.PRNGKey(0)
    kx, kw, kx2 = jax.random.split(key, 3)

    # Case 1: small f32 input consistent with the module's forward
    # (batch, seq, hidden) -> RMSNorm over hidden.
    batch, seq, hidden = 2, 8, 128
    x = jax.random.normal(kx, (batch, seq, hidden), dtype=jnp.float32)
    # Deterministic "checkpoint-like" weight (~1.0 with a small perturbation).
    weight = 1.0 + 0.01 * jax.random.normal(kw, (hidden,), dtype=jnp.float32)

    out = rmsnorm(x, weight, eps=1e-5)
    out = jax.block_until_ready(out)
    ref = rmsnorm_ref(x, weight, eps=1e-5)
    assert out.shape == (batch, seq, hidden)
    assert jnp.allclose(out, ref, atol=1e-5, rtol=1e-5), "f32 mismatch vs reference"

    # Case 2: bf16 input with a row count that is not tile-aligned, exercising
    # the ragged-last-block path (no pad / slice in the wrapper).
    b2, s2, h2 = 2, 5, 256
    x_bf16 = jax.random.normal(kx2, (b2, s2, h2), dtype=jnp.float32).astype(jnp.bfloat16)
    w2 = 1.0 + 0.01 * jax.random.normal(kw, (h2,), dtype=jnp.float32)

    out2 = rmsnorm(x_bf16, w2, eps=1e-5)
    out2 = jax.block_until_ready(out2)
    ref2 = rmsnorm_ref(x_bf16, w2, eps=1e-5)
    assert out2.shape == (b2, s2, h2)
    assert jnp.allclose(
        out2.astype(jnp.float32), ref2.astype(jnp.float32), atol=2e-2, rtol=2e-2
    ), "bf16 mismatch vs reference"

    print("KERNEL_OK")
</pallas_src>

<mosaic_0001>
module attributes {stable_mosaic.version = 11 : i64} {
  func.func @_rmsnorm_kernel(%arg0: i32, %arg1: memref<8x128xf32, #tpu.memory_space<vmem>>, %arg2: memref<1x128xf32, #tpu.memory_space<vmem>>, %arg3: memref<8x128xf32, #tpu.memory_space<vmem>>) attributes {dimension_semantics = [#tpu.dimension_semantics<parallel>], iteration_bounds = array<i64: 2>, scalar_prefetch = 0 : i64, scratch_operands = 0 : i64, tpu.core_type = #tpu.core_type<tc>, window_params = [{transform_indices = @transform_0, window_bounds = array<i64: 8, 128>}, {pipeline_mode = #tpu.pipeline_mode<synchronous>, transform_indices = @transform_1, window_bounds = array<i64: 1, 128>}, {transform_indices = @transform_2, window_bounds = array<i64: 8, 128>}]} {
    %c0 = arith.constant 0 : index
    %c0_0 = arith.constant 0 : index
    %0 = vector.load %arg1[%c0, %c0_0] : memref<8x128xf32, #tpu.memory_space<vmem>>, vector<8x128xf32>
    %1 = arith.mulf %0, %0 : vector<8x128xf32>
    %cst = arith.constant dense<0.000000e+00> : vector<8xf32>
    %2 = vector.multi_reduction <add>, %1, %cst [1] : vector<8x128xf32> to vector<8xf32>
    %3 = vector.shape_cast %2 : vector<8xf32> to vector<8x1xf32>
    %cst_1 = arith.constant 7.812500e-03 : f32
    %4 = vector.broadcast %cst_1 : f32 to vector<8x1xf32>
    %5 = arith.mulf %3, %4 : vector<8x1xf32>
    %cst_2 = arith.constant 9.99999974E-6 : f32
    %6 = vector.broadcast %cst_2 : f32 to vector<8x1xf32>
    %7 = arith.addf %5, %6 : vector<8x1xf32>
    %8 = math.rsqrt %7 : vector<8x1xf32>
    %c0_3 = arith.constant 0 : index
    %c0_4 = arith.constant 0 : index
    %9 = vector.load %arg2[%c0_3, %c0_4] : memref<1x128xf32, #tpu.memory_space<vmem>>, vector<1x128xf32>
    %10 = vector.broadcast %8 : vector<8x1xf32> to vector<8x128xf32>
    %11 = arith.mulf %0, %10 : vector<8x128xf32>
    %12 = vector.broadcast %9 : vector<1x128xf32> to vector<8x128xf32>
    %13 = arith.mulf %11, %12 : vector<8x128xf32>
    %c0_5 = arith.constant 0 : index
    %c0_6 = arith.constant 0 : index
    %14 = vector.load %arg3[%c0_5, %c0_6] : memref<8x128xf32, #tpu.memory_space<vmem>>, vector<8x128xf32>
    tpu.vector_store %arg3[%c0_5, %c0_6], %13 {strides = array<i32>} : memref<8x128xf32, #tpu.memory_space<vmem>>, vector<8x128xf32>,
    return
  }
  func.func @transform_0(%arg0: i32) -> (i32, i32) {
    %c0_i32 = arith.constant 0 : i32
    %c0_i32_0 = arith.constant 0 : i32
    return %arg0, %c0_i32 : i32, i32
  }
  func.func @transform_1(%arg0: i32) -> (i32, i32) {
    %c0_i32 = arith.constant 0 : i32
    %c0_i32_0 = arith.constant 0 : i32
    %c0_i32_1 = arith.constant 0 : i32
    return %c0_i32, %c0_i32_0 : i32, i32
  }
  func.func @transform_2(%arg0: i32) -> (i32, i32) {
    %c0_i32 = arith.constant 0 : i32
    %c0_i32_0 = arith.constant 0 : i32
    return %arg0, %c0_i32 : i32, i32
  }
}

</mosaic_0001>

<llo_original>
// kernel: tpu_custom_call.1
$region0: #{tpu_custom_call.1}
  #allocation0 [shape = 'u32[]', space=smem, size = 0x4, offset = 0x4, fixed_abs, tag = 'smem constant byte address 0x4 - core index']
  #allocation1 [shape = 'u32[144,128]{1,0:T(1,128)}', space=vmem, size = 0x12000, scoped, tag = 'internal scratch']
  %s0 = inlined_call_operand.hbm [shape: f32[16,128], index: 0, kind: input, shape index: {}]
  %s1 = inlined_call_operand.hbm [shape: f32[1,128], index: 1, kind: input, shape index: {}]
  %s2 = inlined_call_operand.hbm [shape: f32[16,128], index: 2, kind: output, shape index: {}]
  %s3 = sld [smem:[#allocation0]]
  $region49: #{tpu_custom_call.1} parent=0
    _
  %s5 = ssub.s32 1, %s3
  %s6 = scalar_select 0, %s5, %s3
  $region1: #{tpu_custom_call.1} parent=0
    #allocation2 [shape = 'u8[8192]{0}', space=vmem, size = 0x2000, scoped, tag = 'input window, operand 0']
    #allocation3 [shape = 's32[2]{0}', space=sflag, size = 0x8, scoped, tag = 'scoped memory for tpu_custom_call.1']
    #allocation4 [shape = 's32[2]{0}', space=sflag, size = 0x8, scoped, tag = 'scoped memory for tpu_custom_call.1']
    #allocation5 [shape = 'u8[512]{0}', space=vmem, size = 0x400, scoped, tag = 'input window, operand 1, single buffered']
    #allocation6 [shape = 's32[1]{0}', space=sflag, size = 0x4, scoped, tag = 'scoped memory for tpu_custom_call.1']
    #allocation7 [shape = 'u8[8192]{0}', space=vmem, size = 0x2000, scoped, tag = 'output window, operand 0']
    %7 = vsyncpa [#allocation3], 0
    %s8 = scalar_lea.sflag [#allocation3], 1
    %9 = vsyncpa %s8, 0
    %10 = vsyncpa [#allocation6], 0
    %11 = vsyncpa [#allocation4], 0
    %s12 = scalar_lea.sflag [#allocation4], 1
    %13 = vsyncpa %s12, 0
    loop: start=0, step=1, limit=4
    $region2: #{tpu_custom_call.1} parent=1 // loop_pre_header
      _
    $region3: #{tpu_custom_call.1} parent=1 // loop_header
      %s15 = sphi 0, %s19
      %p16 = scmp.ge.s32.totalorder %s15, 4
      %s25 = sphi 0, %s27
      %s28 = sphi 0, %s25
      %s29 = sphi 0, %s28
      %s45 = sphi 0, %s29
      %s49 = sphi 0, %s49
      %s51 = sphi 0, %s49
      %s52 = sphi 0, %s51
      %s66 = sphi 0, %s52
      %s72 = sphi 0, %s74
      %s75 = sphi 0, %s72
      %s76 = sphi 0, %s75
      %s92 = sphi 0, %s76
    $region4: #{tpu_custom_call.1} parent=1 // loop_header_branch
      %18 = sbr.rel (%p16) target = $region8
    $region5: #{tpu_custom_call.1} parent=1 // loop_body
      %s20 = ssub.s32 %s15, 1
      %s21 = ssub.s32 %s15, 2
      %s22 = sadd.s32 %s15, 1
      %s23 = ssub.s32 %s15, %s22
      %p24 = scmp.eq.s32.totalorder %s23, 0
      %s26 = sadd.s32 %s25, 1
      %s27 = scalar_select %p24, %s25, %s26
      %p30 = pneg %p24
      %p31 = scmp.eq.s32.totalorder %s15, 1
      %p32 = por %p30, %p31
      %p33 = scmp.ne.s32.totalorder %s25, %s28
      %p34 = scmp.eq.s32.totalorder %s15, 0
      %p35 = por %p33, %p34
      %p36 = scmp.ne.s32.totalorder %s25, %s28
      %p37 = scmp.eq.s32.totalorder %s20, 1
      %p38 = por %p36, %p37
      %p39 = scmp.ne.s32.totalorder %s28, %s29
      %p40 = scmp.eq.s32.totalorder %s20, 0
      %p41 = por %p39, %p40
      %p42 = scmp.ne.s32.totalorder %s28, %s29
      %p43 = scmp.eq.s32.totalorder %s21, 1
      %p44 = por %p42, %p43
      %p46 = scmp.ne.s32.totalorder %s29, %s45
      %p47 = scmp.eq.s32.totalorder %s21, 0
      %p48 = por %p46, %p47
      %s50 = sadd.s32 %s49, 1
      %p53 = scmp.eq.s32.totalorder %s15, 1
      %p54 = scmp.ne.s32.totalorder %s49, %s51
      %p55 = scmp.eq.s32.totalorder %s15, 0
      %p56 = por %p54, %p55
      %p57 = scmp.ne.s32.totalorder %s49, %s51
      %p58 = scmp.eq.s32.totalorder %s20, 1
      %p59 = por %p57, %p58
      %p60 = scmp.ne.s32.totalorder %s51, %s52
      %p61 = scmp.eq.s32.totalorder %s20, 0
      %p62 = por %p60, %p61
      %p63 = scmp.ne.s32.totalorder %s51, %s52
      %p64 = scmp.eq.s32.totalorder %s21, 1
      %p65 = por %p63, %p64
      %p67 = scmp.ne.s32.totalorder %s52, %s66
      %p68 = scmp.eq.s32.totalorder %s21, 0
      %p69 = por %p67, %p68
      %s70 = ssub.s32 %s15, %s22
      %p71 = scmp.eq.s32.totalorder %s70, 0
      %s73 = sadd.s32 %s72, 1
      %s74 = scalar_select %p71, %s72, %s73
      %p77 = pneg %p71
      %p78 = scmp.eq.s32.totalorder %s15, 1
      %p79 = por %p77, %p78
      %p80 = scmp.ne.s32.totalorder %s72, %s75
      %p81 = scmp.eq.s32.totalorder %s15, 0
      %p82 = por %p80, %p81
      %p83 = scmp.ne.s32.totalorder %s72, %s75
      %p84 = scmp.eq.s32.totalorder %s20, 1
      %p85 = por %p83, %p84
      %p86 = scmp.ne.s32.totalorder %s75, %s76
      %p87 = scmp.eq.s32.totalorder %s20, 0
      %p88 = por %p86, %p87
      %p89 = scmp.ne.s32.totalorder %s75, %s76
      %p90 = scmp.eq.s32.totalorder %s21, 1
      %p91 = por %p89, %p90
      %p93 = scmp.ne.s32.totalorder %s76, %s92
      %p94 = scmp.eq.s32.totalorder %s21, 0
      %p95 = por %p93, %p94
      %p96 = scmp.le.s32.totalorder 1, %s15
      %p97 = scmp.lt.s32.totalorder %s15, 3
      %p98 = pnand %p96, %p97
      %p99 = pneg %p98
      // Predicated region
      $region9: #{tpu_custom_call.1} parent=5 // pred_check
        _
      $region10: #{tpu_custom_call.1} parent=5 // pred_check_branch
        %101 = sbr.rel (%p98) target = $region12
      $region11: #{tpu_custom_call.1} parent=5 // pred_region
        %s102 = ssub.s32 %s15, 1
        // Predicated region
        $region13: #{tpu_custom_call.1} parent=11 // pred_check
          %p103 = pneg %p62
        $region14: #{tpu_custom_call.1} parent=11 // pred_check_branch
          %105 = sbr.rel (%p103) target = $region16
        $region15: #{tpu_custom_call.1} parent=11 // pred_region
          %s107 = ssub.s32 16, 16
          %108 = vsyncadd [#allocation6], %s107
          %s110 = sshll.u32 [#allocation5], 4
          %s111 = int_to_ptr.vmem [resolvable:$true] %s110
          %113 = dma.hbm_to_vmem [thread:$0]  %s1, 16, %s111, [#allocation6]
        $region16: #{tpu_custom_call.1} parent=11 // pred_fallthru
          _
      $region12: #{tpu_custom_call.1} parent=5 // pred_fallthru
        _
      %p114 = scmp.lt.s32.totalorder %s15, 2
      // Predicated region
      $region17: #{tpu_custom_call.1} parent=5 // pred_check
        %p115 = pneg %p114
      $region18: #{tpu_custom_call.1} parent=5 // pred_check_branch
        %117 = sbr.rel (%p115) target = $region20
      $region19: #{tpu_custom_call.1} parent=5 // pred_region
        // Predicated region
        $region21: #{tpu_custom_call.1} parent=19 // pred_check
          %p118 = pneg %p35
        $region22: #{tpu_custom_call.1} parent=19 // pred_check_branch
          %120 = sbr.rel (%p118) target = $region24
        $region23: #{tpu_custom_call.1} parent=19 // pred_region
          %s121 = sand.u32 %s25, 1
          %s122 = scalar_lea.sflag [#allocation3], %s121
          %s123 = sand.u32 %s25, 1
          %s124 = smul.addr %s123, 8
          %s125 = scalar_lea.vmem [#allocation2], %s124
          %s127 = ssub.s32 128, 128
          %128 = vsyncadd %s122, %s127
          %s129 = smul.addr %s15, 128
          %s130 = scalar_lea.hbm %s0, %s129
          %s132 = sshll.u32 %s125, 4
          %s133 = int_to_ptr.vmem [resolvable:$true] %s132
          %135 = dma.hbm_to_vmem [thread:$0]  %s130, 128, %s133, %s122
        $region24: #{tpu_custom_call.1} parent=19 // pred_fallthru
          _
      $region20: #{tpu_custom_call.1} parent=5 // pred_fallthru
        _
      %p136 = scmp.le.s32.totalorder 1, %s15
      %p137 = scmp.lt.s32.totalorder %s15, 3
      %p138 = pnand %p136, %p137
      %p139 = pneg %p138
      // Predicated region
      $region25: #{tpu_custom_call.1} parent=5 // pred_check
        _
      $region26: #{tpu_custom_call.1} parent=5 // pred_check_branch
        %141 = sbr.rel (%p138) target = $region28
      $region27: #{tpu_custom_call.1} parent=5 // pred_region
        %s142 = ssub.s32 %s15, 1
        %s143 = sand.u32 %s28, 1
        %s144 = scalar_lea.sflag [#allocation3], %s143
        %s145 = sand.u32 %s28, 1
        %s146 = smul.addr %s145, 8
        %s147 = scalar_lea.vmem [#allocation2], %s146
        // Predicated region
        $region29: #{tpu_custom_call.1} parent=27 // pred_check
          %p148 = pneg %p41
        $region30: #{tpu_custom_call.1} parent=27 // pred_check_branch
          %150 = sbr.rel (%p148) target = $region32
        $region31: #{tpu_custom_call.1} parent=27 // pred_region
          %151 = dma.done %s144, 128
        $region32: #{tpu_custom_call.1} parent=27 // pred_fallthru
          _
        // Predicated region
        $region33: #{tpu_custom_call.1} parent=27 // pred_check
          %p152 = pneg %p62
        $region34: #{tpu_custom_call.1} parent=27 // pred_check_branch
          %154 = sbr.rel (%p152) target = $region36
        $region35: #{tpu_custom_call.1} parent=27 // pred_region
          %155 = dma.done [#allocation6], 16
        $region36: #{tpu_custom_call.1} parent=27 // pred_fallthru
          _
        %s156 = sand.u32 %s28, 1
        %s157 = scalar_lea.sflag [#allocation3], %s156
        %s158 = sand.u32 %s28, 1
        %s159 = smul.addr %s158, 8
        %s160 = scalar_lea.vmem [#allocation2], %s159
        %p161 = pneg %p41
        %p162 = pneg %p38
        %p163 = pneg %p62
        %p164 = pneg %p59
        %p165 = pneg %p88
        %p166 = pneg %p85
        %s167 = sand.u32 %s75, 1
        %s168 = scalar_lea.sflag [#allocation4], %s167
        %s169 = sand.u32 %s75, 1
        %s170 = smul.addr %s169, 8
        %s171 = scalar_lea.vmem [#allocation7], %s170
        %v172 = vld [vmem:[%s147] sm:$0xff]
        %v173 = vmul.f32 %v172, %v172
        %174 = vadd.xlane.f32.xlu0 %v173
        %v175 = vpop.xlane.xlu0 %174
        %v176 = vmul.f32 %v175, 0.0078125
        %v177 = vadd.f32 %v176, 1e-05
        %v178 = vrsqrt.pop %v177
        %v179 = vld [vmem:[#allocation5] sm:$0x1]
        %v180 = vmul.f32 %v172, %v178
        %v182 = vlaneseq
        %v183 = vshrl.u32 %v182, 7
        %v184 = vsub.s32 0, %v183
        %v185 = vrot.slane %v179, %v184
        %v187 = vmul.f32 %v180, %v185
        %188 = vst [vmem:[%s171] sm:$0xff] %v187
        %s189 = sand.u32 %s75, 1
        %s190 = scalar_lea.sflag [#allocation4], %s189
        %s191 = sand.u32 %s75, 1
        %s192 = smul.addr %s191, 8
        %s193 = scalar_lea.vmem [#allocation7], %s192
        // Predicated region
        $region37: #{tpu_custom_call.1} parent=27 // pred_check
          %p194 = pneg %p85
        $region38: #{tpu_custom_call.1} parent=27 // pred_check_branch
          %196 = sbr.rel (%p194) target = $region40
        $region39: #{tpu_custom_call.1} parent=27 // pred_region
          %s198 = ssub.s32 128, 128
          %199 = vsyncadd %s190, %s198
          %s200 = smul.addr %s20, 128
          %s201 = scalar_lea.hbm %s2, %s200
          %s203 = sshll.u32 %s193, 4
          %s204 = int_to_ptr.vmem [resolvable:$true] %s203
          %206 = dma.vmem_to_hbm [thread:$0]  %s204, 128, %s201, %s190
        $region40: #{tpu_custom_call.1} parent=27 // pred_fallthru
          _
      $region28: #{tpu_custom_call.1} parent=5 // pred_fallthru
        _
      %p207 = scmp.le.s32.totalorder 2, %s15
      // Predicated region
      $region41: #{tpu_custom_call.1} parent=5 // pred_check
        %p208 = pneg %p207
      $region42: #{tpu_custom_call.1} parent=5 // pred_check_branch
        %210 = sbr.rel (%p208) target = $region44
      $region43: #{tpu_custom_call.1} parent=5 // pred_region
        %s211 = ssub.s32 %s15, 2
        // Predicated region
        $region45: #{tpu_custom_call.1} parent=43 // pred_check
          %p212 = pneg %p91
        $region46: #{tpu_custom_call.1} parent=43 // pred_check_branch
          %214 = sbr.rel (%p212) target = $region48
        $region47: #{tpu_custom_call.1} parent=43 // pred_region
          %s215 = sand.u32 %s76, 1
          %s216 = scalar_lea.sflag [#allocation4], %s215
          %s217 = sand.u32 %s76, 1
          %s218 = smul.addr %s217, 8
          %s219 = scalar_lea.vmem [#allocation7], %s218
          %220 = dma.done %s216, 128
        $region48: #{tpu_custom_call.1} parent=43 // pred_fallthru
          _
      $region44: #{tpu_custom_call.1} parent=5 // pred_fallthru
        _
    $region6: #{tpu_custom_call.1} parent=1 // loop_footer
      %s19 = sadd.s32 1, %s15
    $region7: #{tpu_custom_call.1} parent=1 // loop_footer_branch
      %14 = sbr.rel target = $region3
    $region8: #{tpu_custom_call.1} parent=1 // loop_exit
      _
    %221 = vsyncpa [#allocation3], 1
    %s222 = scalar_lea.sflag [#allocation3], 1
    %223 = vsyncpa %s222, 1
    %224 = vsyncpa [#allocation6], 1
    %225 = vsyncpa [#allocation4], 1
    %s226 = scalar_lea.sflag [#allocation4], 1
    %227 = vsyncpa %s226, 1

</llo_original>
